<compile_context>
chip_gen: v7x
topology: tpu7x:2x2x1
jax: 0.10.0
libtpu: 0.0.40
codegen_flags: <defaults>
</compile_context>

<pallas_src>
import math
import functools

import jax
import jax.numpy as jnp
from jax import lax
from jax.experimental import pallas as pl
from jax.experimental.pallas import tpu as pltpu

MAX_SEQ_LEN = 512


# --------------------------------------------------------------------------
# Deterministic buffer construction (same math as the torch __init__)
# --------------------------------------------------------------------------
def build_pe(d_model, max_len=MAX_SEQ_LEN, dtype=jnp.float32):
    position = jnp.arange(max_len, dtype=jnp.float32)[:, None]            # (L, 1)
    div_term = jnp.exp(
        jnp.arange(0, d_model, 2, dtype=jnp.float32) * (-math.log(10000.0) / d_model)
    )                                                                      # (D/2,)
    pe = jnp.zeros((max_len, d_model), dtype=jnp.float32)
    pe = pe.at[:, 0::2].set(jnp.sin(position * div_term))
    pe = pe.at[:, 1::2].set(jnp.cos(position * div_term))
    return pe.astype(dtype)


# --------------------------------------------------------------------------
# Kernels
# --------------------------------------------------------------------------
def pe_add_kernel(x_ref, pe_ref, o_ref):
    # eval-mode forward: dropout is identity.  Batch dim is Squeezed -> 2-D tiles.
    o_ref[...] = (x_ref[...] + pe_ref[...]).astype(o_ref.dtype)


def _splitmix32(h):
    # splitmix32 finalizer: good avalanche for sequential counters, int ops only.
    h = (h ^ (h >> 16)) * jnp.uint32(0x7FEB352D)
    h = (h ^ (h >> 15)) * jnp.uint32(0x846CA68B)
    return h ^ (h >> 16)


def pe_add_dropout_kernel(seed_ref, x_ref, pe_ref, o_ref, *,
                          p, seq_len, tile_s, d_model):
    # training-mode forward: inverted dropout with a counter-based hash PRNG
    # (deterministic per seed; cannot bitwise-match torch's RNG stream).
    b = pl.program_id(0)
    s = pl.program_id(1)

    y = (x_ref[...] + pe_ref[...]).astype(jnp.float32)

    shape = (tile_s, d_model)
    row = lax.broadcasted_iota(jnp.int32, shape, 0).astype(jnp.uint32)
    col = lax.broadcasted_iota(jnp.int32, shape, 1).astype(jnp.uint32)

    # Unique per-element counter across the whole (B, S, D) tensor.
    base_row = (b * seq_len + s * tile_s).astype(jnp.uint32)
    counter = (base_row + row) * jnp.uint32(d_model) + col

    key = seed_ref[0].astype(jnp.uint32) * jnp.uint32(0x9E3779B9) + jnp.uint32(0x85EBCA6B)
    bits = _splitmix32(counter ^ key)

    # Integer-threshold compare on raw bits (drop iff bits < p * 2^32).
    threshold = jnp.uint32(min(int(p * 4294967296.0), 4294967295))
    keep = bits >= threshold
    scale = jnp.float32(1.0 / (1.0 - p))
    o_ref[...] = jnp.where(keep, y * scale, jnp.float32(0.0)).astype(o_ref.dtype)


# --------------------------------------------------------------------------
# Wrapper
# --------------------------------------------------------------------------
def _pick_tile_s(S, D, itemsize, budget_bytes=1 << 20):
    # Largest multiple of 8 keeping one (tS, D) buffer under ~1 MiB; with
    # double-buffered x/pe/out this stays far below the 32 MiB scoped VMEM on v7x.
    if S <= 8:
        return S
    rows = max(8, budget_bytes // max(1, D * itemsize))
    t = min(S, rows, 512)
    return max(8, (t // 8) * 8)


def positional_encoding_forward(x, pe, *, dropout_p=0.1, training=False,
                                seed=0, tile_s=None):
    B, S, D = x.shape
    # TODO(synk): for d_model not a multiple of 128, pad/reshape here so the
    # output block stays lane-dense (avoids masked vst.msk partial stores).
    pe_slice = pe[:S, :].astype(x.dtype)   # slice buffer + match activation dtype

    if tile_s is None:
        tile_s = _pick_tile_s(S, D, x.dtype.itemsize)
    tile_s = min(tile_s, S)
    n_s_tiles = pl.cdiv(S, tile_s)
    grid = (B, n_s_tiles)

    cparams = pltpu.CompilerParams(dimension_semantics=("parallel", "parallel"))

    if (not training) or dropout_p == 0.0:
        grid_spec = pltpu.PrefetchScalarGridSpec(
            num_scalar_prefetch=0,
            grid=grid,
            in_specs=[
                pl.BlockSpec((pl.Squeezed(), tile_s, D), lambda b, s: (b, s, 0)),
                pl.BlockSpec((tile_s, D), lambda b, s: (s, 0)),
            ],
            out_specs=pl.BlockSpec((pl.Squeezed(), tile_s, D), lambda b, s: (b, s, 0)),
        )
        return pl.pallas_call(
            pe_add_kernel,
            out_shape=jax.ShapeDtypeStruct(x.shape, x.dtype),
            grid_spec=grid_spec,
            compiler_params=cparams,
        )(x, pe_slice)

    seed_arr = jnp.array([seed], dtype=jnp.int32)
    kernel = functools.partial(
        pe_add_dropout_kernel, p=float(dropout_p),
        seq_len=S, tile_s=tile_s, d_model=D,
    )
    grid_spec = pltpu.PrefetchScalarGridSpec(
        num_scalar_prefetch=1,
        grid=grid,
        in_specs=[
            pl.BlockSpec((pl.Squeezed(), tile_s, D), lambda b, s, seed: (b, s, 0)),
            pl.BlockSpec((tile_s, D), lambda b, s, seed: (s, 0)),
        ],
        out_specs=pl.BlockSpec((pl.Squeezed(), tile_s, D), lambda b, s, seed: (b, s, 0)),
    )
    return pl.pallas_call(
        kernel,
        out_shape=jax.ShapeDtypeStruct(x.shape, x.dtype),
        grid_spec=grid_spec,
        compiler_params=cparams,
    )(seed_arr, x, pe_slice)


# --------------------------------------------------------------------------
# Demo / correctness check
# --------------------------------------------------------------------------
if __name__ == "__main__":
    # small but lane-dense: batch=2, seq=16, d_model=128; tile_s=8 -> grid (2, 2)
    B, S, D = 2, 16, 128

    key = jax.random.PRNGKey(0)
    x = jax.random.normal(key, (B, S, D), dtype=jnp.float32)
    pe = build_pe(D)

    # eval-mode forward (dropout = identity) matches torch module.eval() exactly
    out_eval = positional_encoding_forward(x, pe, dropout_p=0.1, training=False, tile_s=8)
    out_eval = jax.block_until_ready(out_eval)
    ref = x + pe[None, :S, :]
    assert out_eval.shape == x.shape and out_eval.dtype == x.dtype
    assert jnp.allclose(out_eval, ref, atol=1e-6, rtol=1e-6)

    # training-mode forward (stochastic inverted dropout, deterministic per seed)
    p = 0.1
    out_train = positional_encoding_forward(x, pe, dropout_p=p, training=True,
                                            seed=1234, tile_s=8)
    out_train = jax.block_until_ready(out_train)
    assert out_train.shape == x.shape
    kept = out_train != 0
    # surviving elements equal (x + pe) / (1 - p); dropped elements are 0
    assert jnp.allclose(jnp.where(kept, out_train, 0.0),
                        jnp.where(kept, ref / (1.0 - p), 0.0), atol=1e-5, rtol=1e-5)
    keep_frac = float(jnp.mean(kept.astype(jnp.float32)))
    assert 0.75 < keep_frac <= 1.0  # ~0.9 expected over 4096 elements

    print("KERNEL_OK")
</pallas_src>

<mosaic_0001>
module attributes {stable_mosaic.version = 11 : i64} {
  func.func @pe_add_kernel(%arg0: i32, %arg1: i32, %arg2: memref<1x8x128xf32, #tpu.memory_space<vmem>>, %arg3: memref<8x128xf32, #tpu.memory_space<vmem>>, %arg4: memref<1x8x128xf32, #tpu.memory_space<vmem>>) attributes {dimension_semantics = [#tpu.dimension_semantics<parallel>, #tpu.dimension_semantics<parallel>], iteration_bounds = array<i64: 2, 2>, scalar_prefetch = 0 : i64, scratch_operands = 0 : i64, tpu.core_type = #tpu.core_type<tc>, window_params = [{transform_indices = @transform_0, window_bounds = array<i64: 1, 8, 128>}, {transform_indices = @transform_1, window_bounds = array<i64: 8, 128>}, {transform_indices = @transform_2, window_bounds = array<i64: 1, 8, 128>}]} {
    %c0 = arith.constant 0 : index
    %c0_0 = arith.constant 0 : index
    %c0_1 = arith.constant 0 : index
    %0 = vector.load %arg2[%c0, %c0_0, %c0_1] : memref<1x8x128xf32, #tpu.memory_space<vmem>>, vector<1x8x128xf32>
    %1 = vector.shape_cast %0 : vector<1x8x128xf32> to vector<8x128xf32>
    %c0_2 = arith.constant 0 : index
    %c0_3 = arith.constant 0 : index
    %2 = vector.load %arg3[%c0_2, %c0_3] : memref<8x128xf32, #tpu.memory_space<vmem>>, vector<8x128xf32>
    %3 = arith.addf %1, %2 : vector<8x128xf32>
    %c0_4 = arith.constant 0 : index
    %c0_5 = arith.constant 0 : index
    %c0_6 = arith.constant 0 : index
    %4 = vector.load %arg4[%c0_4, %c0_5, %c0_6] : memref<1x8x128xf32, #tpu.memory_space<vmem>>, vector<1x8x128xf32>
    %5 = vector.shape_cast %4 : vector<1x8x128xf32> to vector<8x128xf32>
    %6 = vector.shape_cast %3 : vector<8x128xf32> to vector<1x8x128xf32>
    tpu.vector_store %arg4[%c0_4, %c0_5, %c0_6], %6 {strides = array<i32>} : memref<1x8x128xf32, #tpu.memory_space<vmem>>, vector<1x8x128xf32>,
    return
  }
  func.func @transform_0(%arg0: i32, %arg1: i32) -> (i32, i32, i32) {
    %c0_i32 = arith.constant 0 : i32
    %c0_i32_0 = arith.constant 0 : i32
    return %arg0, %arg1, %c0_i32 : i32, i32, i32
  }
  func.func @transform_1(%arg0: i32, %arg1: i32) -> (i32, i32) {
    %c0_i32 = arith.constant 0 : i32
    %c0_i32_0 = arith.constant 0 : i32
    return %arg1, %c0_i32 : i32, i32
  }
  func.func @transform_2(%arg0: i32, %arg1: i32) -> (i32, i32, i32) {
    %c0_i32 = arith.constant 0 : i32
    %c0_i32_0 = arith.constant 0 : i32
    return %arg0, %arg1, %c0_i32 : i32, i32, i32
  }
}

</mosaic_0001>

<llo_original>
// kernel: tpu_custom_call.1
$region0: #{tpu_custom_call.1}
  #allocation0 [shape = 'u32[]', space=smem, size = 0x4, offset = 0x4, fixed_abs, tag = 'smem constant byte address 0x4 - core index']
  #allocation1 [shape = 'u32[144,128]{1,0:T(1,128)}', space=vmem, size = 0x12000, scoped, tag = 'internal scratch']
  %s0 = inlined_call_operand.hbm [shape: f32[2,16,128], index: 0, kind: input, shape index: {}]
  %s1 = inlined_call_operand.hbm [shape: f32[16,128], index: 1, kind: input, shape index: {}]
  %s2 = inlined_call_operand.hbm [shape: f32[2,16,128], index: 2, kind: output, shape index: {}]
  %s3 = sld [smem:[#allocation0]]
  $region49: #{tpu_custom_call.1} parent=0
    _
  %s5 = ssub.s32 1, %s3
  %s6 = scalar_select 0, %s5, %s3
  $region1: #{tpu_custom_call.1} parent=0
    #allocation2 [shape = 'u8[8192]{0}', space=vmem, size = 0x2000, scoped, tag = 'input window, operand 0']
    #allocation3 [shape = 's32[2]{0}', space=sflag, size = 0x8, scoped, tag = 'scoped memory for tpu_custom_call.1']
    #allocation4 [shape = 's32[2]{0}', space=sflag, size = 0x8, scoped, tag = 'scoped memory for tpu_custom_call.1']
    #allocation5 [shape = 'u8[8192]{0}', space=vmem, size = 0x2000, scoped, tag = 'input window, operand 1']
    #allocation6 [shape = 's32[2]{0}', space=sflag, size = 0x8, scoped, tag = 'scoped memory for tpu_custom_call.1']
    #allocation7 [shape = 'u8[8192]{0}', space=vmem, size = 0x2000, scoped, tag = 'output window, operand 0']
    %7 = vsyncpa [#allocation3], 0
    %s8 = scalar_lea.sflag [#allocation3], 1
    %9 = vsyncpa %s8, 0
    %10 = vsyncpa [#allocation6], 0
    %s11 = scalar_lea.sflag [#allocation6], 1
    %12 = vsyncpa %s11, 0
    %13 = vsyncpa [#allocation4], 0
    %s14 = scalar_lea.sflag [#allocation4], 1
    %15 = vsyncpa %s14, 0
    loop: start=0, step=1, limit=6
    $region2: #{tpu_custom_call.1} parent=1 // loop_pre_header
      _
    $region3: #{tpu_custom_call.1} parent=1 // loop_header
      %s17 = sphi 0, %s21
      %p18 = scmp.ge.s32.totalorder %s17, 6
      %s24 = sphi 0, %s36
      %s25 = sphi 0, %s32
      %s26 = sphi 0, %s24
      %s27 = sphi 0, %s25
      %s28 = sphi 0, %s26
      %s29 = sphi 0, %s27
      %s41 = sphi 0, %s43
      %s44 = sphi 0, %s41
      %s45 = sphi 0, %s44
      %s61 = sphi 0, %s45
      %s67 = sphi 0, %s69
      %s70 = sphi 0, %s67
      %s71 = sphi 0, %s70
      %s87 = sphi 0, %s71
      %s95 = sphi 0, %s97
      %s98 = sphi 0, %s95
      %s99 = sphi 0, %s98
      %s115 = sphi 0, %s99
    $region4: #{tpu_custom_call.1} parent=1 // loop_header_branch
      %20 = sbr.rel (%p18) target = $region8
    $region5: #{tpu_custom_call.1} parent=1 // loop_body
      %s22 = ssub.s32 %s17, 1
      %s23 = ssub.s32 %s17, 2
      %s30 = sadd.s32 1, %s25
      %p31 = scmp.ge.s32.totalorder %s30, 2
      %s32 = scalar_select %p31, 0, %s30
      %s33 = sadd.s32 1, %s24
      %s34 = scalar_select %p31, %s33, %s24
      %p35 = scmp.ge.s32.totalorder %s34, 2
      %s36 = scalar_select %p35, 0, %s34
      %s37 = ssub.s32 %s24, %s36
      %s38 = ssub.s32 %s25, %s32
      %s39 = sor.u32 %s37, %s38
      %p40 = scmp.eq.s32.totalorder %s39, 0
      %s42 = sadd.s32 %s41, 1
      %s43 = scalar_select %p40, %s41, %s42
      %p46 = pneg %p40
      %p47 = scmp.eq.s32.totalorder %s17, 3
      %p48 = por %p46, %p47
      %p49 = scmp.ne.s32.totalorder %s41, %s44
      %p50 = scmp.eq.s32.totalorder %s17, 0
      %p51 = por %p49, %p50
      %p52 = scmp.ne.s32.totalorder %s41, %s44
      %p53 = scmp.eq.s32.totalorder %s22, 3
      %p54 = por %p52, %p53
      %p55 = scmp.ne.s32.totalorder %s44, %s45
      %p56 = scmp.eq.s32.totalorder %s22, 0
      %p57 = por %p55, %p56
      %p58 = scmp.ne.s32.totalorder %s44, %s45
      %p59 = scmp.eq.s32.totalorder %s23, 3
      %p60 = por %p58, %p59
      %p62 = scmp.ne.s32.totalorder %s45, %s61
      %p63 = scmp.eq.s32.totalorder %s23, 0
      %p64 = por %p62, %p63
      %s65 = ssub.s32 %s25, %s32
      %p66 = scmp.eq.s32.totalorder %s65, 0
      %s68 = sadd.s32 %s67, 1
      %s69 = scalar_select %p66, %s67, %s68
      %p72 = pneg %p66
      %p73 = scmp.eq.s32.totalorder %s17, 3
      %p74 = por %p72, %p73
      %p75 = scmp.ne.s32.totalorder %s67, %s70
      %p76 = scmp.eq.s32.totalorder %s17, 0
      %p77 = por %p75, %p76
      %p78 = scmp.ne.s32.totalorder %s67, %s70
      %p79 = scmp.eq.s32.totalorder %s22, 3
      %p80 = por %p78, %p79
      %p81 = scmp.ne.s32.totalorder %s70, %s71
      %p82 = scmp.eq.s32.totalorder %s22, 0
      %p83 = por %p81, %p82
      %p84 = scmp.ne.s32.totalorder %s70, %s71
      %p85 = scmp.eq.s32.totalorder %s23, 3
      %p86 = por %p84, %p85
      %p88 = scmp.ne.s32.totalorder %s71, %s87
      %p89 = scmp.eq.s32.totalorder %s23, 0
      %p90 = por %p88, %p89
      %s91 = ssub.s32 %s24, %s36
      %s92 = ssub.s32 %s25, %s32
      %s93 = sor.u32 %s91, %s92
      %p94 = scmp.eq.s32.totalorder %s93, 0
      %s96 = sadd.s32 %s95, 1
      %s97 = scalar_select %p94, %s95, %s96
      %p100 = pneg %p94
      %p101 = scmp.eq.s32.totalorder %s17, 3
      %p102 = por %p100, %p101
      %p103 = scmp.ne.s32.totalorder %s95, %s98
      %p104 = scmp.eq.s32.totalorder %s17, 0
      %p105 = por %p103, %p104
      %p106 = scmp.ne.s32.totalorder %s95, %s98
      %p107 = scmp.eq.s32.totalorder %s22, 3
      %p108 = por %p106, %p107
      %p109 = scmp.ne.s32.totalorder %s98, %s99
      %p110 = scmp.eq.s32.totalorder %s22, 0
      %p111 = por %p109, %p110
      %p112 = scmp.ne.s32.totalorder %s98, %s99
      %p113 = scmp.eq.s32.totalorder %s23, 3
      %p114 = por %p112, %p113
      %p116 = scmp.ne.s32.totalorder %s99, %s115
      %p117 = scmp.eq.s32.totalorder %s23, 0
      %p118 = por %p116, %p117
      %p119 = scmp.le.s32.totalorder 1, %s17
      %p120 = scmp.lt.s32.totalorder %s17, 5
      %p121 = pnand %p119, %p120
      %p122 = pneg %p121
      // Predicated region
      $region9: #{tpu_custom_call.1} parent=5 // pred_check
        _
      $region10: #{tpu_custom_call.1} parent=5 // pred_check_branch
        %124 = sbr.rel (%p121) target = $region12
      $region11: #{tpu_custom_call.1} parent=5 // pred_region
        %s125 = ssub.s32 %s17, 1
      $region12: #{tpu_custom_call.1} parent=5 // pred_fallthru
        _
      %p126 = scmp.lt.s32.totalorder %s17, 4
      // Predicated region
      $region13: #{tpu_custom_call.1} parent=5 // pred_check
        %p127 = pneg %p126
      $region14: #{tpu_custom_call.1} parent=5 // pred_check_branch
        %129 = sbr.rel (%p127) target = $region16
      $region15: #{tpu_custom_call.1} parent=5 // pred_region
        // Predicated region
        $region17: #{tpu_custom_call.1} parent=15 // pred_check
          %p130 = pneg %p51
        $region18: #{tpu_custom_call.1} parent=15 // pred_check_branch
          %132 = sbr.rel (%p130) target = $region20
        $region19: #{tpu_custom_call.1} parent=15 // pred_region
          %s133 = sand.u32 %s41, 1
          %s134 = scalar_lea.sflag [#allocation3], %s133
          %s135 = sand.u32 %s41, 1
          %s136 = smul.addr %s135, 8
          %s137 = scalar_lea.vmem [#allocation2], %s136
          %s139 = ssub.s32 128, 128
          %140 = vsyncadd %s134, %s139
          %s141 = smul.addr %s24, 2
          %s142 = sadd.s32 %s25, %s141
          %s143 = smul.addr %s142, 128
          %s144 = scalar_lea.hbm %s0, %s143
          %s146 = sshll.u32 %s137, 4
          %s147 = int_to_ptr.vmem [resolvable:$true] %s146
          %149 = dma.hbm_to_vmem [thread:$0]  %s144, 128, %s147, %s134
        $region20: #{tpu_custom_call.1} parent=15 // pred_fallthru
          _
        // Predicated region
        $region21: #{tpu_custom_call.1} parent=15 // pred_check
          %p150 = pneg %p77
        $region22: #{tpu_custom_call.1} parent=15 // pred_check_branch
          %152 = sbr.rel (%p150) target = $region24
        $region23: #{tpu_custom_call.1} parent=15 // pred_region
          %s153 = sand.u32 %s67, 1
          %s154 = scalar_lea.sflag [#allocation6], %s153
          %s155 = sand.u32 %s67, 1
          %s156 = smul.addr %s155, 8
          %s157 = scalar_lea.vmem [#allocation5], %s156
          %s159 = ssub.s32 128, 128
          %160 = vsyncadd %s154, %s159
          %s161 = smul.addr %s25, 128
          %s162 = scalar_lea.hbm %s1, %s161
          %s164 = sshll.u32 %s157, 4
          %s165 = int_to_ptr.vmem [resolvable:$true] %s164
          %167 = dma.hbm_to_vmem [thread:$0]  %s162, 128, %s165, %s154
        $region24: #{tpu_custom_call.1} parent=15 // pred_fallthru
          _
      $region16: #{tpu_custom_call.1} parent=5 // pred_fallthru
        _
      %p168 = scmp.le.s32.totalorder 1, %s17
      %p169 = scmp.lt.s32.totalorder %s17, 5
      %p170 = pnand %p168, %p169
      %p171 = pneg %p170
      // Predicated region
      $region25: #{tpu_custom_call.1} parent=5 // pred_check
        _
      $region26: #{tpu_custom_call.1} parent=5 // pred_check_branch
        %173 = sbr.rel (%p170) target = $region28
      $region27: #{tpu_custom_call.1} parent=5 // pred_region
        %s174 = ssub.s32 %s17, 1
        %s175 = sand.u32 %s44, 1
        %s176 = scalar_lea.sflag [#allocation3], %s175
        %s177 = sand.u32 %s44, 1
        %s178 = smul.addr %s177, 8
        %s179 = scalar_lea.vmem [#allocation2], %s178
        // Predicated region
        $region29: #{tpu_custom_call.1} parent=27 // pred_check
          %p180 = pneg %p57
        $region30: #{tpu_custom_call.1} parent=27 // pred_check_branch
          %182 = sbr.rel (%p180) target = $region32
        $region31: #{tpu_custom_call.1} parent=27 // pred_region
          %183 = dma.done %s176, 128
        $region32: #{tpu_custom_call.1} parent=27 // pred_fallthru
          _
        %s184 = sand.u32 %s70, 1
        %s185 = scalar_lea.sflag [#allocation6], %s184
        %s186 = sand.u32 %s70, 1
        %s187 = smul.addr %s186, 8
        %s188 = scalar_lea.vmem [#allocation5], %s187
        // Predicated region
        $region33: #{tpu_custom_call.1} parent=27 // pred_check
          %p189 = pneg %p83
        $region34: #{tpu_custom_call.1} parent=27 // pred_check_branch
          %191 = sbr.rel (%p189) target = $region36
        $region35: #{tpu_custom_call.1} parent=27 // pred_region
          %192 = dma.done %s185, 128
        $region36: #{tpu_custom_call.1} parent=27 // pred_fallthru
          _
        %s193 = sand.u32 %s44, 1
        %s194 = scalar_lea.sflag [#allocation3], %s193
        %s195 = sand.u32 %s44, 1
        %s196 = smul.addr %s195, 8
        %s197 = scalar_lea.vmem [#allocation2], %s196
        %p198 = pneg %p57
        %p199 = pneg %p54
        %s200 = sand.u32 %s70, 1
        %s201 = scalar_lea.sflag [#allocation6], %s200
        %s202 = sand.u32 %s70, 1
        %s203 = smul.addr %s202, 8
        %s204 = scalar_lea.vmem [#allocation5], %s203
        %p205 = pneg %p83
        %p206 = pneg %p80
        %p207 = pneg %p111
        %p208 = pneg %p108
        %s209 = sand.u32 %s98, 1
        %s210 = scalar_lea.sflag [#allocation4], %s209
        %s211 = sand.u32 %s98, 1
        %s212 = smul.addr %s211, 8
        %s213 = scalar_lea.vmem [#allocation7], %s212
        %v214 = vld [vmem:[%s179] sm:$0xff]
        %v215 = vld [vmem:[%s188] sm:$0xff]
        %v216 = vadd.f32 %v214, %v215
        %217 = vst [vmem:[%s213] sm:$0xff] %v216
        %s218 = sand.u32 %s98, 1
        %s219 = scalar_lea.sflag [#allocation4], %s218
        %s220 = sand.u32 %s98, 1
        %s221 = smul.addr %s220, 8
        %s222 = scalar_lea.vmem [#allocation7], %s221
        // Predicated region
        $region37: #{tpu_custom_call.1} parent=27 // pred_check
          %p223 = pneg %p108
        $region38: #{tpu_custom_call.1} parent=27 // pred_check_branch
          %225 = sbr.rel (%p223) target = $region40
        $region39: #{tpu_custom_call.1} parent=27 // pred_region
          %s227 = ssub.s32 128, 128
          %228 = vsyncadd %s219, %s227
          %s229 = smul.addr %s26, 2
          %s230 = sadd.s32 %s27, %s229
          %s231 = smul.addr %s230, 128
          %s232 = scalar_lea.hbm %s2, %s231
          %s234 = sshll.u32 %s222, 4
          %s235 = int_to_ptr.vmem [resolvable:$true] %s234
          %237 = dma.vmem_to_hbm [thread:$0]  %s235, 128, %s232, %s219
        $region40: #{tpu_custom_call.1} parent=27 // pred_fallthru
          _
      $region28: #{tpu_custom_call.1} parent=5 // pred_fallthru
        _
      %p238 = scmp.le.s32.totalorder 2, %s17
      // Predicated region
      $region41: #{tpu_custom_call.1} parent=5 // pred_check
        %p239 = pneg %p238
      $region42: #{tpu_custom_call.1} parent=5 // pred_check_branch
        %241 = sbr.rel (%p239) target = $region44
      $region43: #{tpu_custom_call.1} parent=5 // pred_region
        %s242 = ssub.s32 %s17, 2
        // Predicated region
        $region45: #{tpu_custom_call.1} parent=43 // pred_check
          %p243 = pneg %p114
        $region46: #{tpu_custom_call.1} parent=43 // pred_check_branch
          %245 = sbr.rel (%p243) target = $region48
        $region47: #{tpu_custom_call.1} parent=43 // pred_region
          %s246 = sand.u32 %s99, 1
          %s247 = scalar_lea.sflag [#allocation4], %s246
          %s248 = sand.u32 %s99, 1
          %s249 = smul.addr %s248, 8
          %s250 = scalar_lea.vmem [#allocation7], %s249
          %251 = dma.done %s247, 128
        $region48: #{tpu_custom_call.1} parent=43 // pred_fallthru
          _
      $region44: #{tpu_custom_call.1} parent=5 // pred_fallthru
        _
    $region6: #{tpu_custom_call.1} parent=1 // loop_footer
      %s21 = sadd.s32 1, %s17
    $region7: #{tpu_custom_call.1} parent=1 // loop_footer_branch
      %16 = sbr.rel target = $region3
    $region8: #{tpu_custom_call.1} parent=1 // loop_exit
      _
    %252 = vsyncpa [#allocation3], 1
    %s253 = scalar_lea.sflag [#allocation3], 1
    %254 = vsyncpa %s253, 1
    %255 = vsyncpa [#allocation6], 1
    %s256 = scalar_lea.sflag [#allocation6], 1
    %257 = vsyncpa %s256, 1
    %258 = vsyncpa [#allocation4], 1
    %s259 = scalar_lea.sflag [#allocation4], 1
    %260 = vsyncpa %s259, 1

</llo_original>
